<compile_context>
chip_gen: v7x
topology: tpu7x:2x2x1
jax: 0.10.0
libtpu: 0.0.40
codegen_flags: <defaults>
</compile_context>

<pallas_src>
import jax
import jax.numpy as jnp
from jax import lax
from jax.experimental import pallas as pl
from jax.experimental.pallas import tpu as pltpu


def _emb_onehot_kernel(idx_ref,     # VMEM (1, Bblk, T)     int32  (codes for codebook q)
                       table_ref,   # VMEM (1, Vp, D)       f32    (one codebook)
                       out_ref):    # VMEM (Bblk, 1, T, D)  f32
    Bblk, _, T, D = out_ref.shape
    Vp = table_ref.shape[1]

    # Clamp negative codes to 0 (matches `index[index < 0] = 0`).
    ids = jnp.maximum(idx_ref[0], 0)                                  # (Bblk, T)

    # One-hot rows (lanes = Vp), then flatten the batch/time dims so the MXU
    # sees one fat (Bblk*T, Vp) @ (Vp, D) matmul per grid step.
    iota_v = lax.broadcasted_iota(jnp.int32, (Bblk, T, Vp), 2)
    onehot = (ids[:, :, None] == iota_v).astype(table_ref.dtype)      # (Bblk, T, Vp)
    onehot2d = onehot.reshape(Bblk * T, Vp)                           # (Bblk*T, Vp)

    emb = jnp.dot(onehot2d, table_ref[0],
                  preferred_element_type=jnp.float32)                 # (Bblk*T, D)
    out_ref[...] = emb.reshape(Bblk, 1, T, D).astype(out_ref.dtype)


def dalle_mask_image_embedding(index, emb_tables, pos_table, *, n_q, b_block=None):
    """Forward pass of DalleMaskImageEmbedding (pos_emb_type='embedding').

    index:      (B, n_q*T) integer codes (negatives allowed -> clamped to 0)
    emb_tables: (n_q, num_embed+1, D) float32 stacked codebook embeddings
    pos_table:  (max_size, D) float32 positional embedding table
    returns:    target_emb (B, n_q, T, D), pos_emb (1, T, D)
    """
    B, L = index.shape
    assert L % n_q == 0
    T = L // n_q
    nq_t, V, D = emb_tables.shape
    assert nq_t == n_q

    if b_block is None:
        b_block = B
    assert B % b_block == 0
    n_bt = B // b_block

    # (n_q, B, T) layout so each grid step loads a dense (Bblk, T) index tile
    # for a single codebook.  This is a tiny int transpose done by XLA.
    idx_q = jnp.transpose(jnp.asarray(index, jnp.int32).reshape(B, n_q, T),
                          (1, 0, 2))

    # Lane-align the one-hot / contraction dimension.  Padded rows are zero
    # and can never be selected by a valid (clamped, in-range) index.
    Vp = ((V + 127) // 128) * 128
    tables = emb_tables if Vp == V else jnp.pad(
        emb_tables, ((0, 0), (0, Vp - V), (0, 0)))

    # Size scoped VMEM from the actual blocks (double-buffered table/idx/out
    # blocks + one-hot temporaries), clamped to sane bounds.
    itemsize = jnp.dtype(emb_tables.dtype).itemsize
    tbl_block = Vp * D * itemsize
    out_block = b_block * T * D * itemsize
    idx_block = b_block * T * 4
    onehot_tmp = b_block * T * Vp * (itemsize + 4)     # one-hot + int iota
    needed = 2 * (tbl_block + out_block + idx_block) + onehot_tmp
    vmem_limit = int(min(100 * 2**20, max(32 * 2**20, needed * 3 // 2)))

    target_emb = pl.pallas_call(
        _emb_onehot_kernel,
        grid=(n_q, n_bt),
        in_specs=[
            # Index tile for (codebook q, batch tile b).
            pl.BlockSpec((1, b_block, T), lambda q, b: (q, b, 0)),
            # One codebook; index depends only on q, so it is fetched once per
            # q and the next codebook's DMA overlaps the current matmul.
            pl.BlockSpec((1, Vp, D), lambda q, b: (q, 0, 0)),
        ],
        out_specs=pl.BlockSpec((b_block, 1, T, D), lambda q, b: (b, q, 0, 0)),
        out_shape=jax.ShapeDtypeStruct((B, n_q, T, D), emb_tables.dtype),
        compiler_params=pltpu.CompilerParams(
            dimension_semantics=("parallel", "parallel"),
            vmem_limit_bytes=vmem_limit),
    )(idx_q, tables)

    # position_ids[:T] == arange(T): static contiguous slice, done in the
    # wrapper (free for XLA).
    pos_emb = pos_table[:T][None]
    return target_emb, pos_emb


if __name__ == "__main__":
    # Small, deterministic configuration consistent with the module:
    #   num_embed=16 (tables have num_embed+1 = 17 rows), embed_dim=128,
    #   n_q=4, max_size=64, batch B=2, tokens per codebook T=8.
    num_embed = 16
    embed_dim = 128
    n_q = 4
    max_size = 64
    B, T = 2, 8

    key = jax.random.PRNGKey(0)
    k_tab, k_pos, k_idx = jax.random.split(key, 3)

    # Deterministic synthetic parameters (nn.Embedding default is N(0, 1)).
    emb_tables = jax.random.normal(
        k_tab, (n_q, num_embed + 1, embed_dim), dtype=jnp.float32)
    pos_table = jax.random.normal(
        k_pos, (max_size, embed_dim), dtype=jnp.float32)

    # Input codes, including negatives to exercise the clamp-to-zero path.
    index = jax.random.randint(
        k_idx, (B, n_q * T), minval=-3, maxval=num_embed + 1, dtype=jnp.int32)

    target_emb, pos_emb = dalle_mask_image_embedding(
        index, emb_tables, pos_table, n_q=n_q)
    jax.block_until_ready((target_emb, pos_emb))

    # Pure-JAX reference for correctness.
    idx_c = jnp.maximum(index.reshape(B, n_q, T), 0)
    ref_target = emb_tables[jnp.arange(n_q)[None, :, None], idx_c]  # (B,n_q,T,D)
    ref_pos = pos_table[:T][None]                                   # (1,T,D)

    assert target_emb.shape == (B, n_q, T, embed_dim)
    assert pos_emb.shape == (1, T, embed_dim)
    assert jnp.allclose(target_emb, ref_target)
    assert jnp.allclose(pos_emb, ref_pos)

    print("KERNEL_OK")
</pallas_src>

<mosaic_0001>
module attributes {stable_mosaic.version = 11 : i64} {
  func.func @_emb_onehot_kernel(%arg0: i32, %arg1: i32, %arg2: memref<1x2x8xi32, #tpu.memory_space<vmem>>, %arg3: memref<1x128x128xf32, #tpu.memory_space<vmem>>, %arg4: memref<2x1x8x128xf32, #tpu.memory_space<vmem>>) attributes {dimension_semantics = [#tpu.dimension_semantics<parallel>, #tpu.dimension_semantics<parallel>], iteration_bounds = array<i64: 4, 1>, scalar_prefetch = 0 : i64, scratch_operands = 0 : i64, tpu.core_type = #tpu.core_type<tc>, window_params = [{transform_indices = @transform_0, window_bounds = array<i64: 1, 2, 8>}, {transform_indices = @transform_1, window_bounds = array<i64: 1, 128, 128>}, {transform_indices = @transform_2, window_bounds = array<i64: 2, 1, 8, 128>}]} {
    %c0 = arith.constant 0 : index
    %c0_0 = arith.constant 0 : index
    %c0_1 = arith.constant 0 : index
    %0 = vector.load %arg2[%c0, %c0_0, %c0_1] : memref<1x2x8xi32, #tpu.memory_space<vmem>>, vector<1x2x8xi32>
    %1 = vector.shape_cast %0 : vector<1x2x8xi32> to vector<2x8xi32>
    %c0_i32 = arith.constant 0 : i32
    %2 = vector.broadcast %c0_i32 : i32 to vector<2x8xi32>
    %3 = arith.maxsi %1, %2 : vector<2x8xi32>
    %4 = tpu.iota {dimensions = array<i32: 2>} : vector<2x8x128xi32>
    %5 = vector.shape_cast %3 : vector<2x8xi32> to vector<2x8x1xi32>
    %6 = vector.broadcast %5 : vector<2x8x1xi32> to vector<2x8x128xi32>
    %7 = arith.cmpi eq, %6, %4 : vector<2x8x128xi32>
    %8 = arith.extui %7 : vector<2x8x128xi1> to vector<2x8x128xi32>
    %9 = arith.sitofp %8 : vector<2x8x128xi32> to vector<2x8x128xf32>
    %10 = vector.shape_cast %9 : vector<2x8x128xf32> to vector<16x128xf32>
    %c0_2 = arith.constant 0 : index
    %c0_3 = arith.constant 0 : index
    %c0_4 = arith.constant 0 : index
    %11 = vector.load %arg3[%c0_2, %c0_3, %c0_4] : memref<1x128x128xf32, #tpu.memory_space<vmem>>, vector<1x128x128xf32>
    %12 = vector.shape_cast %11 : vector<1x128x128xf32> to vector<128x128xf32>
    %cst = arith.constant dense<0.000000e+00> : vector<16x128xf32>
    %13 = tpu.matmul %10, %12, %cst {dimension_numbers = #tpu.dot_dimension_numbers<[1], [0], [0], [1], [0, 0, 1, 1], [], []>} : vector<16x128xf32>, vector<128x128xf32>, vector<16x128xf32> -> vector<16x128xf32>
    %14 = vector.shape_cast %13 : vector<16x128xf32> to vector<2x1x8x128xf32>
    %c0_5 = arith.constant 0 : index
    %c0_6 = arith.constant 0 : index
    %c0_7 = arith.constant 0 : index
    %c0_8 = arith.constant 0 : index
    %15 = vector.load %arg4[%c0_5, %c0_6, %c0_7, %c0_8] : memref<2x1x8x128xf32, #tpu.memory_space<vmem>>, vector<2x1x8x128xf32>
    tpu.vector_store %arg4[%c0_5, %c0_6, %c0_7, %c0_8], %14 {strides = array<i32>} : memref<2x1x8x128xf32, #tpu.memory_space<vmem>>, vector<2x1x8x128xf32>,
    return
  }
  func.func @transform_0(%arg0: i32, %arg1: i32) -> (i32, i32, i32) {
    %c0_i32 = arith.constant 0 : i32
    %c0_i32_0 = arith.constant 0 : i32
    return %arg0, %arg1, %c0_i32 : i32, i32, i32
  }
  func.func @transform_1(%arg0: i32, %arg1: i32) -> (i32, i32, i32) {
    %c0_i32 = arith.constant 0 : i32
    %c0_i32_0 = arith.constant 0 : i32
    %c0_i32_1 = arith.constant 0 : i32
    return %arg0, %c0_i32, %c0_i32_0 : i32, i32, i32
  }
  func.func @transform_2(%arg0: i32, %arg1: i32) -> (i32, i32, i32, i32) {
    %c0_i32 = arith.constant 0 : i32
    %c0_i32_0 = arith.constant 0 : i32
    %c0_i32_1 = arith.constant 0 : i32
    return %arg1, %arg0, %c0_i32, %c0_i32_0 : i32, i32, i32, i32
  }
}

</mosaic_0001>

<llo_original>
// kernel: tpu_custom_call.1
$region0: #{tpu_custom_call.1}
  #allocation0 [shape = 'u32[]', space=smem, size = 0x4, offset = 0x4, fixed_abs, tag = 'smem constant byte address 0x4 - core index']
  #allocation1 [shape = 'u32[144,128]{1,0:T(1,128)}', space=vmem, size = 0x12000, scoped, tag = 'internal scratch']
  %s0 = inlined_call_operand.hbm [shape: s32[4,2,8], index: 0, kind: input, shape index: {}]
  %s1 = inlined_call_operand.hbm [shape: f32[4,128,128], index: 1, kind: input, shape index: {}]
  %s2 = inlined_call_operand.hbm [shape: f32[2,4,8,128], index: 2, kind: output, shape index: {}]
  %s3 = sld [smem:[#allocation0]]
  $region49: #{tpu_custom_call.1} parent=0
    _
  %s5 = ssub.s32 1, %s3
  %s6 = scalar_select 0, %s5, %s3
  $region1: #{tpu_custom_call.1} parent=0
    #allocation2 [shape = 'u8[2048]{0}', space=vmem, size = 0x800, scoped, tag = 'input window, operand 0']
    #allocation3 [shape = 's32[2]{0}', space=sflag, size = 0x8, scoped, tag = 'scoped memory for tpu_custom_call.1']
    #allocation4 [shape = 's32[2]{0}', space=sflag, size = 0x8, scoped, tag = 'scoped memory for tpu_custom_call.1']
    #allocation5 [shape = 'u8[131072]{0}', space=vmem, size = 0x20000, scoped, tag = 'input window, operand 1']
    #allocation6 [shape = 's32[2]{0}', space=sflag, size = 0x8, scoped, tag = 'scoped memory for tpu_custom_call.1']
    #allocation7 [shape = 'u8[16384]{0}', space=vmem, size = 0x4000, scoped, tag = 'output window, operand 0']
    %7 = vsyncpa [#allocation3], 0
    %s8 = scalar_lea.sflag [#allocation3], 1
    %9 = vsyncpa %s8, 0
    %10 = vsyncpa [#allocation6], 0
    %s11 = scalar_lea.sflag [#allocation6], 1
    %12 = vsyncpa %s11, 0
    %13 = vsyncpa [#allocation4], 0
    %s14 = scalar_lea.sflag [#allocation4], 1
    %15 = vsyncpa %s14, 0
    loop: start=0, step=1, limit=6
    $region2: #{tpu_custom_call.1} parent=1 // loop_pre_header
      _
    $region3: #{tpu_custom_call.1} parent=1 // loop_header
      %s17 = sphi 0, %s21
      %p18 = scmp.ge.s32.totalorder %s17, 6
      %s24 = sphi 0, %s36
      %s25 = sphi 0, %s32
      %s26 = sphi 0, %s24
      %s27 = sphi 0, %s25
      %s28 = sphi 0, %s26
      %s29 = sphi 0, %s27
      %s41 = sphi 0, %s43
      %s44 = sphi 0, %s41
      %s45 = sphi 0, %s44
      %s61 = sphi 0, %s45
      %s67 = sphi 0, %s69
      %s70 = sphi 0, %s67
      %s71 = sphi 0, %s70
      %s87 = sphi 0, %s71
      %s95 = sphi 0, %s97
      %s98 = sphi 0, %s95
      %s99 = sphi 0, %s98
      %s115 = sphi 0, %s99
    $region4: #{tpu_custom_call.1} parent=1 // loop_header_branch
      %20 = sbr.rel (%p18) target = $region8
    $region5: #{tpu_custom_call.1} parent=1 // loop_body
      %s22 = ssub.s32 %s17, 1
      %s23 = ssub.s32 %s17, 2
      %s30 = sadd.s32 1, %s25
      %p31 = scmp.ge.s32.totalorder %s30, 1
      %s32 = scalar_select %p31, 0, %s30
      %s33 = sadd.s32 1, %s24
      %s34 = scalar_select %p31, %s33, %s24
      %p35 = scmp.ge.s32.totalorder %s34, 4
      %s36 = scalar_select %p35, 0, %s34
      %s37 = ssub.s32 %s24, %s36
      %s38 = ssub.s32 %s25, %s32
      %s39 = sor.u32 %s37, %s38
      %p40 = scmp.eq.s32.totalorder %s39, 0
      %s42 = sadd.s32 %s41, 1
      %s43 = scalar_select %p40, %s41, %s42
      %p46 = pneg %p40
      %p47 = scmp.eq.s32.totalorder %s17, 3
      %p48 = por %p46, %p47
      %p49 = scmp.ne.s32.totalorder %s41, %s44
      %p50 = scmp.eq.s32.totalorder %s17, 0
      %p51 = por %p49, %p50
      %p52 = scmp.ne.s32.totalorder %s41, %s44
      %p53 = scmp.eq.s32.totalorder %s22, 3
      %p54 = por %p52, %p53
      %p55 = scmp.ne.s32.totalorder %s44, %s45
      %p56 = scmp.eq.s32.totalorder %s22, 0
      %p57 = por %p55, %p56
      %p58 = scmp.ne.s32.totalorder %s44, %s45
      %p59 = scmp.eq.s32.totalorder %s23, 3
      %p60 = por %p58, %p59
      %p62 = scmp.ne.s32.totalorder %s45, %s61
      %p63 = scmp.eq.s32.totalorder %s23, 0
      %p64 = por %p62, %p63
      %s65 = ssub.s32 %s24, %s36
      %p66 = scmp.eq.s32.totalorder %s65, 0
      %s68 = sadd.s32 %s67, 1
      %s69 = scalar_select %p66, %s67, %s68
      %p72 = pneg %p66
      %p73 = scmp.eq.s32.totalorder %s17, 3
      %p74 = por %p72, %p73
      %p75 = scmp.ne.s32.totalorder %s67, %s70
      %p76 = scmp.eq.s32.totalorder %s17, 0
      %p77 = por %p75, %p76
      %p78 = scmp.ne.s32.totalorder %s67, %s70
      %p79 = scmp.eq.s32.totalorder %s22, 3
      %p80 = por %p78, %p79
      %p81 = scmp.ne.s32.totalorder %s70, %s71
      %p82 = scmp.eq.s32.totalorder %s22, 0
      %p83 = por %p81, %p82
      %p84 = scmp.ne.s32.totalorder %s70, %s71
      %p85 = scmp.eq.s32.totalorder %s23, 3
      %p86 = por %p84, %p85
      %p88 = scmp.ne.s32.totalorder %s71, %s87
      %p89 = scmp.eq.s32.totalorder %s23, 0
      %p90 = por %p88, %p89
      %s91 = ssub.s32 %s25, %s32
      %s92 = ssub.s32 %s24, %s36
      %s93 = sor.u32 %s91, %s92
      %p94 = scmp.eq.s32.totalorder %s93, 0
      %s96 = sadd.s32 %s95, 1
      %s97 = scalar_select %p94, %s95, %s96
      %p100 = pneg %p94
      %p101 = scmp.eq.s32.totalorder %s17, 3
      %p102 = por %p100, %p101
      %p103 = scmp.ne.s32.totalorder %s95, %s98
      %p104 = scmp.eq.s32.totalorder %s17, 0
      %p105 = por %p103, %p104
      %p106 = scmp.ne.s32.totalorder %s95, %s98
      %p107 = scmp.eq.s32.totalorder %s22, 3
      %p108 = por %p106, %p107
      %p109 = scmp.ne.s32.totalorder %s98, %s99
      %p110 = scmp.eq.s32.totalorder %s22, 0
      %p111 = por %p109, %p110
      %p112 = scmp.ne.s32.totalorder %s98, %s99
      %p113 = scmp.eq.s32.totalorder %s23, 3
      %p114 = por %p112, %p113
      %p116 = scmp.ne.s32.totalorder %s99, %s115
      %p117 = scmp.eq.s32.totalorder %s23, 0
      %p118 = por %p116, %p117
      %p119 = scmp.le.s32.totalorder 1, %s17
      %p120 = scmp.lt.s32.totalorder %s17, 5
      %p121 = pnand %p119, %p120
      %p122 = pneg %p121
      // Predicated region
      $region9: #{tpu_custom_call.1} parent=5 // pred_check
        _
      $region10: #{tpu_custom_call.1} parent=5 // pred_check_branch
        %124 = sbr.rel (%p121) target = $region12
      $region11: #{tpu_custom_call.1} parent=5 // pred_region
        %s125 = ssub.s32 %s17, 1
      $region12: #{tpu_custom_call.1} parent=5 // pred_fallthru
        _
      %p126 = scmp.lt.s32.totalorder %s17, 4
      // Predicated region
      $region13: #{tpu_custom_call.1} parent=5 // pred_check
        %p127 = pneg %p126
      $region14: #{tpu_custom_call.1} parent=5 // pred_check_branch
        %129 = sbr.rel (%p127) target = $region16
      $region15: #{tpu_custom_call.1} parent=5 // pred_region
        // Predicated region
        $region17: #{tpu_custom_call.1} parent=15 // pred_check
          %p130 = pneg %p51
        $region18: #{tpu_custom_call.1} parent=15 // pred_check_branch
          %132 = sbr.rel (%p130) target = $region20
        $region19: #{tpu_custom_call.1} parent=15 // pred_region
          %s133 = sand.u32 %s41, 1
          %s134 = scalar_lea.sflag [#allocation3], %s133
          %s135 = sand.u32 %s41, 1
          %s136 = smul.addr %s135, 2
          %s137 = scalar_lea.vmem [#allocation2], %s136
          %s139 = ssub.s32 32, 32
          %140 = vsyncadd %s134, %s139
          %s141 = sadd.s32 %s25, %s24
          %s142 = smul.addr %s141, 32
          %s143 = scalar_lea.hbm %s0, %s142
          %s145 = sshll.u32 %s137, 4
          %s146 = int_to_ptr.vmem [resolvable:$true] %s145
          %148 = dma.hbm_to_vmem [thread:$0]  %s143, 32, %s146, %s134
        $region20: #{tpu_custom_call.1} parent=15 // pred_fallthru
          _
        // Predicated region
        $region21: #{tpu_custom_call.1} parent=15 // pred_check
          %p149 = pneg %p77
        $region22: #{tpu_custom_call.1} parent=15 // pred_check_branch
          %151 = sbr.rel (%p149) target = $region24
        $region23: #{tpu_custom_call.1} parent=15 // pred_region
          %s152 = sand.u32 %s67, 1
          %s153 = scalar_lea.sflag [#allocation6], %s152
          %s154 = sand.u32 %s67, 1
          %s155 = smul.addr %s154, 128
          %s156 = scalar_lea.vmem [#allocation5], %s155
          %s158 = ssub.s32 2048, 2048
          %159 = vsyncadd %s153, %s158
          %s160 = smul.addr %s24, 16
          %s161 = smul.addr %s160, 128
          %s162 = scalar_lea.hbm %s1, %s161
          %s163 = sshll.u32 %s156, 4
          %s164 = int_to_ptr.vmem [resolvable:$true] %s163
          %169 = dma.hbm_to_vmem [thread:$0]  %s162, 2048, %s164, %s153, 128, 128, 8
        $region24: #{tpu_custom_call.1} parent=15 // pred_fallthru
          _
      $region16: #{tpu_custom_call.1} parent=5 // pred_fallthru
        _
      %p170 = scmp.le.s32.totalorder 1, %s17
      %p171 = scmp.lt.s32.totalorder %s17, 5
      %p172 = pnand %p170, %p171
      %p173 = pneg %p172
      // Predicated region
      $region25: #{tpu_custom_call.1} parent=5 // pred_check
        _
      $region26: #{tpu_custom_call.1} parent=5 // pred_check_branch
        %175 = sbr.rel (%p172) target = $region28
      $region27: #{tpu_custom_call.1} parent=5 // pred_region
        %s176 = ssub.s32 %s17, 1
        %s177 = sand.u32 %s44, 1
        %s178 = scalar_lea.sflag [#allocation3], %s177
        %s179 = sand.u32 %s44, 1
        %s180 = smul.addr %s179, 2
        %s181 = scalar_lea.vmem [#allocation2], %s180
        // Predicated region
        $region29: #{tpu_custom_call.1} parent=27 // pred_check
          %p182 = pneg %p57
        $region30: #{tpu_custom_call.1} parent=27 // pred_check_branch
          %184 = sbr.rel (%p182) target = $region32
        $region31: #{tpu_custom_call.1} parent=27 // pred_region
          %185 = dma.done %s178, 32
        $region32: #{tpu_custom_call.1} parent=27 // pred_fallthru
          _
        %s186 = sand.u32 %s70, 1
        %s187 = scalar_lea.sflag [#allocation6], %s186
        %s188 = sand.u32 %s70, 1
        %s189 = smul.addr %s188, 128
        %s190 = scalar_lea.vmem [#allocation5], %s189
        // Predicated region
        $region33: #{tpu_custom_call.1} parent=27 // pred_check
          %p191 = pneg %p83
        $region34: #{tpu_custom_call.1} parent=27 // pred_check_branch
          %193 = sbr.rel (%p191) target = $region36
        $region35: #{tpu_custom_call.1} parent=27 // pred_region
          %194 = dma.done %s187, 2048
        $region36: #{tpu_custom_call.1} parent=27 // pred_fallthru
          _
        %s195 = sand.u32 %s44, 1
        %s196 = scalar_lea.sflag [#allocation3], %s195
        %s197 = sand.u32 %s44, 1
        %s198 = smul.addr %s197, 2
        %s199 = scalar_lea.vmem [#allocation2], %s198
        %p200 = pneg %p57
        %p201 = pneg %p54
        %s202 = sand.u32 %s70, 1
        %s203 = scalar_lea.sflag [#allocation6], %s202
        %s204 = sand.u32 %s70, 1
        %s205 = smul.addr %s204, 128
        %s206 = scalar_lea.vmem [#allocation5], %s205
        %p207 = pneg %p83
        %p208 = pneg %p80
        %p209 = pneg %p111
        %p210 = pneg %p108
        %s211 = sand.u32 %s98, 1
        %s212 = scalar_lea.sflag [#allocation4], %s211
        %s213 = sand.u32 %s98, 1
        %s214 = smul.addr %s213, 16
        %s215 = scalar_lea.vmem [#allocation7], %s214
        %s216 = smul.u32 2, %s27
        %v217 = vld [vmem:[%s181] sm:$0x3]
        %vm218 = vcmp.gt.s32.totalorder %v217, 0
        %v219 = vsel %vm218, %v217, 0
        %v220 = vlaneseq
        %v221 = vand.u32 %v220, 127
        %v222 = vlaneseq
        %v223 = vshrl.u32 %v222, 7
        %v224 = vsub.s32 0, %v223
        %v225 = vrot.slane %v219, %v224
        %227 = vbcast.lane.b32.xlu0 %v225, 256
        %v228 = vpop.permute.xlu0 %227
        %v229 = vlaneseq
        %v230 = vshrl.u32 %v229, 7
        %v231 = vsub.s32 1, %v230
        %v232 = vrot.slane %v219, %v231
        %234 = vbcast.lane.b32.xlu0 %v232, 256
        %v235 = vpop.permute.xlu0 %234
        %vm236 = vcmp.eq.s32.totalorder %v228, %v221
        %vm237 = vcmp.eq.s32.totalorder %v235, %v221
        %v238 = vsel %vm236, 1, 0
        %v239 = vsel %vm237, 1, 0
        %v240 = vcvt.s32.f32 %v238
        %v241 = vcvt.s32.f32 %v239
        %v242 = vld [vmem:[%s190] sm:$0xff]
        %v243 = vld [vmem:[%s190 + $0x8] sm:$0xff]
        %v244 = vld [vmem:[%s190 + $0x10] sm:$0xff]
        %v245 = vld [vmem:[%s190 + $0x18] sm:$0xff]
        %v246 = vld [vmem:[%s190 + $0x20] sm:$0xff]
        %v247 = vld [vmem:[%s190 + $0x28] sm:$0xff]
        %v248 = vld [vmem:[%s190 + $0x30] sm:$0xff]
        %v249 = vld [vmem:[%s190 + $0x38] sm:$0xff]
        %v250 = vld [vmem:[%s190 + $0x40] sm:$0xff]
        %v251 = vld [vmem:[%s190 + $0x48] sm:$0xff]
        %v252 = vld [vmem:[%s190 + $0x50] sm:$0xff]
        %v253 = vld [vmem:[%s190 + $0x58] sm:$0xff]
        %v254 = vld [vmem:[%s190 + $0x60] sm:$0xff]
        %v255 = vld [vmem:[%s190 + $0x68] sm:$0xff]
        %v256 = vld [vmem:[%s190 + $0x70] sm:$0xff]
        %v257 = vld [vmem:[%s190 + $0x78] sm:$0xff]
        %258 = vmatprep.subr.mxu0 0.0
        %259 = vmatpush1.msra.mxu0 %v242
        %260 = vmatprep.subr.mxu0 0.0
        %261 = vmatpush1.msra.mxu0 %v243
        %262 = vmatprep.subr.mxu0 0.0
        %263 = vmatpush1.msra.mxu0 %v244
        %264 = vmatprep.subr.mxu0 0.0
        %265 = vmatpush1.msra.mxu0 %v245
        %266 = vmatprep.subr.mxu0 0.0
        %267 = vmatpush1.msra.mxu0 %v246
        %268 = vmatprep.subr.mxu0 0.0
        %269 = vmatpush1.msra.mxu0 %v247
        %270 = vmatprep.subr.mxu0 0.0
        %271 = vmatpush1.msra.mxu0 %v248
        %272 = vmatprep.subr.mxu0 0.0
        %273 = vmatpush1.msra.mxu0 %v249
        %274 = vmatprep.subr.mxu0 0.0
        %275 = vmatpush1.msra.mxu0 %v250
        %276 = vmatprep.subr.mxu0 0.0
        %277 = vmatpush1.msra.mxu0 %v251
        %278 = vmatprep.subr.mxu0 0.0
        %279 = vmatpush1.msra.mxu0 %v252
        %280 = vmatprep.subr.mxu0 0.0
        %281 = vmatpush1.msra.mxu0 %v253
        %282 = vmatprep.subr.mxu0 0.0
        %283 = vmatpush1.msra.mxu0 %v254
        %284 = vmatprep.subr.mxu0 0.0
        %285 = vmatpush1.msra.mxu0 %v255
        %286 = vmatprep.subr.mxu0 0.0
        %287 = vmatpush1.msra.mxu0 %v256
        %288 = vmatprep.subr.mxu0 0.0
        %289 = vmatpush1.msra.mxu0 %v257
        %290 = vmatprep.subr.mxu0 0.0
        %291 = vmatpush1.msra.mxu0 0.0
        %292 = vmatprep.subr.mxu0 0.0
        %293 = vmatpush1.msra.mxu0 0.0
        %294 = vmatprep.subr.mxu0 0.0
        %295 = vmatpush1.msra.mxu0 0.0
        %296 = vmatprep.subr.mxu0 0.0
        %297 = vmatpush1.msra.mxu0 0.0
        %298 = vmatprep.subr.mxu0 0.0
        %299 = vmatpush1.msra.mxu0 0.0
        %300 = vmatprep.subr.mxu0 0.0
        %301 = vmatpush1.msra.mxu0 0.0
        %302 = vmatprep.subr.mxu0 0.0
        %303 = vmatpush1.msra.mxu0 0.0
        %304 = vmatprep.subr.mxu0 0.0
        %305 = vmatpush1.msra.mxu0 0.0
        %306 = vmatprep.subr.mxu0 0.0
        %307 = vmatpush1.msra.mxu0 0.0
        %308 = vmatprep.subr.mxu0 0.0
        %309 = vmatpush1.msra.mxu0 0.0
        %310 = vmatprep.subr.mxu0 0.0
        %311 = vmatpush1.msra.mxu0 0.0
        %312 = vmatprep.subr.mxu0 0.0
        %313 = vmatpush1.msra.mxu0 0.0
        %314 = vmatprep.subr.mxu0 0.0
        %315 = vmatpush1.msra.mxu0 0.0
        %316 = vmatprep.subr.mxu0 0.0
        %317 = vmatpush1.msra.mxu0 0.0
        %318 = vmatprep.subr.mxu0 0.0
        %319 = vmatpush1.msra.mxu0 0.0
        %320 = vmatprep.subr.mxu0 0.0
        %321 = vmatpush1.msra.mxu0 0.0
        %322 = vmatprep.mubr.f32.mxu0 0.0
        %323 = vmatmul.mubr.f32.gmra.mrb[0].mxu0 %v240
        %v324 = vpop.f32.mrb[0].mxu0
        %v325 = vadd.f32 0.0, %v324
        %v326 = vpop.f32.mrb[0].mxu0
        %327 = vmatprep.mubr.f32.mxu0 0.0
        %328 = vmatmul.mubr.f32.gmra.mrb[0].mxu0 %v241
        %v329 = vpop.f32.mrb[0].mxu0
        %v330 = vadd.f32 0.0, %v329
        %v331 = vpop.f32.mrb[0].mxu0
        %332 = vdwg.mxu0
        %333 = vst [vmem:[%s215] sm:$0xff] %v325
        %334 = vst [vmem:[%s215 + $0x8] sm:$0xff] %v330
        %s335 = sand.u32 %s98, 1
        %s336 = scalar_lea.sflag [#allocation4], %s335
        %s337 = sand.u32 %s98, 1
        %s338 = smul.addr %s337, 16
        %s339 = scalar_lea.vmem [#allocation7], %s338
        // Predicated region
        $region37: #{tpu_custom_call.1} parent=27 // pred_check
          %p340 = pneg %p108
        $region38: #{tpu_custom_call.1} parent=27 // pred_check_branch
          %342 = sbr.rel (%p340) target = $region40
        $region39: #{tpu_custom_call.1} parent=27 // pred_region
          %s343 = smul.u32 2, %s27
          %s345 = ssub.s32 256, 256
          %346 = vsyncadd %s336, %s345
          %s347 = smul.addr %s343, 4
          %s348 = sadd.s32 %s26, %s347
          %s349 = smul.addr %s348, 128
          %s350 = scalar_lea.hbm %s2, %s349
          %s351 = sshll.u32 %s339, 4
          %s352 = int_to_ptr.vmem [resolvable:$true] %s351
          %357 = dma.vmem_to_hbm [thread:$0]  %s352, 256, %s350, %s336, 128, 512, 8
        $region40: #{tpu_custom_call.1} parent=27 // pred_fallthru
          _
      $region28: #{tpu_custom_call.1} parent=5 // pred_fallthru
        _
      %p358 = scmp.le.s32.totalorder 2, %s17
      // Predicated region
      $region41: #{tpu_custom_call.1} parent=5 // pred_check
        %p359 = pneg %p358
      $region42: #{tpu_custom_call.1} parent=5 // pred_check_branch
        %361 = sbr.rel (%p359) target = $region44
      $region43: #{tpu_custom_call.1} parent=5 // pred_region
        %s362 = ssub.s32 %s17, 2
        // Predicated region
        $region45: #{tpu_custom_call.1} parent=43 // pred_check
          %p363 = pneg %p114
        $region46: #{tpu_custom_call.1} parent=43 // pred_check_branch
          %365 = sbr.rel (%p363) target = $region48
        $region47: #{tpu_custom_call.1} parent=43 // pred_region
          %s366 = sand.u32 %s99, 1
          %s367 = scalar_lea.sflag [#allocation4], %s366
          %s368 = sand.u32 %s99, 1
          %s369 = smul.addr %s368, 16
          %s370 = scalar_lea.vmem [#allocation7], %s369
          %371 = dma.done %s367, 256
        $region48: #{tpu_custom_call.1} parent=43 // pred_fallthru
          _
      $region44: #{tpu_custom_call.1} parent=5 // pred_fallthru
        _
    $region6: #{tpu_custom_call.1} parent=1 // loop_footer
      %s21 = sadd.s32 1, %s17
    $region7: #{tpu_custom_call.1} parent=1 // loop_footer_branch
      %16 = sbr.rel target = $region3
    $region8: #{tpu_custom_call.1} parent=1 // loop_exit
      _
    %372 = vsyncpa [#allocation3], 1
    %s373 = scalar_lea.sflag [#allocation3], 1
    %374 = vsyncpa %s373, 1
    %375 = vsyncpa [#allocation6], 1
    %s376 = scalar_lea.sflag [#allocation6], 1
    %377 = vsyncpa %s376, 1
    %378 = vsyncpa [#allocation4], 1
    %s379 = scalar_lea.sflag [#allocation4], 1
    %380 = vsyncpa %s379, 1

</llo_original>
